<compile_context>
chip_gen: v5e
topology: v5e:2x2
jax: 0.10.0
libtpu: 0.0.40
codegen_flags: <defaults>
</compile_context>

<pallas_src>
import functools

import jax
import jax.numpy as jnp
from jax.experimental import pallas as pl
from jax.experimental.pallas import tpu as pltpu


def _sampling_kernel(mu_ref, logvar_ref, eps_ref, out_ref):
    # All elementwise: exp on the EUP slot, mul/add on the VPU.
    mu = mu_ref[...].astype(jnp.float32)
    log_var = logvar_ref[...].astype(jnp.float32)
    eps = eps_ref[...].astype(jnp.float32)
    std = jnp.exp(0.5 * log_var)
    out_ref[...] = (mu + std * eps).astype(out_ref.dtype)


def _batch_tile(batch: int, enc: int) -> int:
    """Pick a batch tile: ~2 MiB per (ref, buffer) at f32, multiple of 8.

    4 refs x 2 pipeline buffers x 2 MiB = ~16 MiB peak, which fits the scoped
    VMEM default on every generation (16 MiB v5e, 32 MiB v6e/v7x).
    """
    target_elems = (2 * 1024 * 1024) // (4 * max(enc, 1))
    tb = max(8, (target_elems // 8) * 8)
    if tb >= batch:
        # Single full-batch block (block_shape equal to the array dim is
        # always legal, even if batch is not a multiple of 8).
        return batch
    return tb


@functools.partial(jax.jit, static_argnames=())
def _sampling_call(mu, log_var, eps):
    B, E = mu.shape
    tb = _batch_tile(B, E)
    spec = pl.BlockSpec((tb, E), lambda i: (i, 0))
    return pl.pallas_call(
        _sampling_kernel,
        out_shape=jax.ShapeDtypeStruct((B, E), mu.dtype),
        grid=(pl.cdiv(B, tb),),
        in_specs=[spec, spec, spec],
        out_specs=spec,
        compiler_params=pltpu.CompilerParams(
            dimension_semantics=("parallel",),
        ),
    )(mu, log_var, eps)


def sampling_layer(mu, log_var, key):
    """Pallas implementation of SamplingLayer.forward(mu, log_var).

    `key` is a jax.random key that drives the Gaussian noise (the analogue of
    torch.normal's fresh randomness); pass a fresh key per call.
    """
    assert mu.shape == log_var.shape, (mu.shape, log_var.shape)
    B, E = mu.shape
    eps = jax.random.normal(key, (B, E), dtype=jnp.float32)
    return _sampling_call(mu, log_var, eps)


if __name__ == "__main__":
    # Small shapes consistent with the module: batch=8, encoding_size=128.
    batch, encoding_size = 8, 128
    key = jax.random.PRNGKey(0)
    k_mu, k_lv, k_eps = jax.random.split(key, 3)

    mu = jax.random.normal(k_mu, (batch, encoding_size), dtype=jnp.float32)
    log_var = 0.1 * jax.random.normal(
        k_lv, (batch, encoding_size), dtype=jnp.float32
    )

    codings = sampling_layer(mu, log_var, k_eps)
    codings = jax.block_until_ready(codings)

    # Shape / dtype / finiteness.
    assert codings.shape == (batch, encoding_size)
    assert codings.dtype == mu.dtype
    assert bool(jnp.all(jnp.isfinite(codings)))

    # Exact reference check: same eps (same key) => identical reparameterization.
    eps_ref = jax.random.normal(k_eps, (batch, encoding_size), dtype=jnp.float32)
    ref = mu + jnp.exp(0.5 * log_var) * eps_ref
    assert bool(jnp.allclose(codings, ref, atol=1e-5, rtol=1e-5))

    # Statistical sanity: residual mean ~ 0, std ~ exp(0.5*log_var) ~ 1.
    resid = codings - mu
    assert float(jnp.abs(jnp.mean(resid))) < 0.2
    assert 0.5 < float(jnp.std(resid)) < 2.0

    print("KERNEL_OK")
</pallas_src>

<mosaic_0001>
module attributes {stable_mosaic.version = 11 : i64} {
  func.func @_sampling_kernel(%arg0: i32, %arg1: memref<8x128xf32, #tpu.memory_space<vmem>>, %arg2: memref<8x128xf32, #tpu.memory_space<vmem>>, %arg3: memref<8x128xf32, #tpu.memory_space<vmem>>, %arg4: memref<8x128xf32, #tpu.memory_space<vmem>>) attributes {dimension_semantics = [#tpu.dimension_semantics<parallel>], iteration_bounds = array<i64: 1>, scalar_prefetch = 0 : i64, scratch_operands = 0 : i64, tpu.core_type = #tpu.core_type<tc>, window_params = [{transform_indices = @transform_0, window_bounds = array<i64: 8, 128>}, {transform_indices = @transform_1, window_bounds = array<i64: 8, 128>}, {transform_indices = @transform_2, window_bounds = array<i64: 8, 128>}, {transform_indices = @transform_3, window_bounds = array<i64: 8, 128>}]} {
    %c0 = arith.constant 0 : index
    %c0_0 = arith.constant 0 : index
    %0 = vector.load %arg1[%c0, %c0_0] : memref<8x128xf32, #tpu.memory_space<vmem>>, vector<8x128xf32>
    %c0_1 = arith.constant 0 : index
    %c0_2 = arith.constant 0 : index
    %1 = vector.load %arg2[%c0_1, %c0_2] : memref<8x128xf32, #tpu.memory_space<vmem>>, vector<8x128xf32>
    %c0_3 = arith.constant 0 : index
    %c0_4 = arith.constant 0 : index
    %2 = vector.load %arg3[%c0_3, %c0_4] : memref<8x128xf32, #tpu.memory_space<vmem>>, vector<8x128xf32>
    %cst = arith.constant 5.000000e-01 : f32
    %3 = vector.broadcast %cst : f32 to vector<8x128xf32>
    %4 = arith.mulf %3, %1 : vector<8x128xf32>
    %5 = math.exp %4 : vector<8x128xf32>
    %6 = arith.mulf %5, %2 : vector<8x128xf32>
    %7 = arith.addf %0, %6 : vector<8x128xf32>
    %c0_5 = arith.constant 0 : index
    %c0_6 = arith.constant 0 : index
    %8 = vector.load %arg4[%c0_5, %c0_6] : memref<8x128xf32, #tpu.memory_space<vmem>>, vector<8x128xf32>
    tpu.vector_store %arg4[%c0_5, %c0_6], %7 {strides = array<i32>} : memref<8x128xf32, #tpu.memory_space<vmem>>, vector<8x128xf32>,
    return
  }
  func.func @transform_0(%arg0: i32) -> (i32, i32) {
    %c0_i32 = arith.constant 0 : i32
    %c0_i32_0 = arith.constant 0 : i32
    return %arg0, %c0_i32 : i32, i32
  }
  func.func @transform_1(%arg0: i32) -> (i32, i32) {
    %c0_i32 = arith.constant 0 : i32
    %c0_i32_0 = arith.constant 0 : i32
    return %arg0, %c0_i32 : i32, i32
  }
  func.func @transform_2(%arg0: i32) -> (i32, i32) {
    %c0_i32 = arith.constant 0 : i32
    %c0_i32_0 = arith.constant 0 : i32
    return %arg0, %c0_i32 : i32, i32
  }
  func.func @transform_3(%arg0: i32) -> (i32, i32) {
    %c0_i32 = arith.constant 0 : i32
    %c0_i32_0 = arith.constant 0 : i32
    return %arg0, %c0_i32 : i32, i32
  }
}

</mosaic_0001>

<llo_original>
// kernel: _sampling_call.1
$region0: #{_sampling_call.1}
  #allocation0 [shape = 'u32[]', space=smem, size = 0x4, offset = 0x4, fixed_abs, tag = 'smem constant byte address 0x4 - core index']
  #allocation1 [shape = 'u32[72,128]{1,0:T(1,128)}', space=vmem, size = 0x9000, scoped, tag = 'internal scratch']
  %s0 = inlined_call_operand.hbm [shape: f32[8,128], index: 0, kind: input, shape index: {}]
  %s1 = inlined_call_operand.hbm [shape: f32[8,128], index: 1, kind: input, shape index: {}]
  %s2 = inlined_call_operand.hbm [shape: f32[8,128], index: 2, kind: input, shape index: {}]
  %s3 = inlined_call_operand.hbm [shape: f32[8,128], index: 3, kind: output, shape index: {}]
  %s4 = sld [smem:[#allocation0]]
  $region34: #{_sampling_call.1} parent=0
    _
  %s6 = ssub.s32 1, %s4
  %s7 = scalar_select 0, %s6, %s4
  $region1: #{_sampling_call.1} parent=0
    #allocation2 [shape = 'u8[4096]{0}', space=vmem, size = 0x1000, scoped, tag = 'input window, operand 0, single buffered']
    #allocation3 [shape = 's32[1]{0}', space=sflag, size = 0x4, scoped, tag = 'scoped memory for _sampling_call.1']
    #allocation4 [shape = 's32[1]{0}', space=sflag, size = 0x4, scoped, tag = 'scoped memory for _sampling_call.1']
    #allocation5 [shape = 'u8[4096]{0}', space=vmem, size = 0x1000, scoped, tag = 'input window, operand 1, single buffered']
    #allocation6 [shape = 's32[1]{0}', space=sflag, size = 0x4, scoped, tag = 'scoped memory for _sampling_call.1']
    #allocation7 [shape = 'u8[4096]{0}', space=vmem, size = 0x1000, scoped, tag = 'input window, operand 2, single buffered']
    #allocation8 [shape = 'u8[4096]{0}', space=vmem, size = 0x1000, scoped, tag = 'output window, operand 0, single buffered']
    %8 = vsyncpa [#allocation3], 0
    %9 = vsyncpa [#allocation6], 0
    %10 = vsyncpa [#allocation4], 0
    // Predicated region
    $region2: #{_sampling_call.1} parent=1 // pred_check
      _
    $region3: #{_sampling_call.1} parent=1 // pred_check_branch
      %12 = sbr.rel (0) target = $region5
    $region4: #{_sampling_call.1} parent=1 // pred_region
      %14 = vsyncadd [#allocation3], 0
      %s16 = sshll.u32 %s0, 4
      %s17 = int_to_ptr.hbm [resolvable:$true] %s16
      %s18 = sshll.u32 [#allocation2], 4
      %s19 = int_to_ptr.vmem [resolvable:$true] %s18
      %21 = dma.hbm_to_vmem [thread:$0]  %s17, 128, %s19, [#allocation3]
    $region5: #{_sampling_call.1} parent=1 // pred_fallthru
      _
    // Predicated region
    $region6: #{_sampling_call.1} parent=1 // pred_check
      _
    $region7: #{_sampling_call.1} parent=1 // pred_check_branch
      %23 = sbr.rel (0) target = $region9
    $region8: #{_sampling_call.1} parent=1 // pred_region
      %25 = vsyncadd [#allocation6], 0
      %s27 = sshll.u32 %s1, 4
      %s28 = int_to_ptr.hbm [resolvable:$true] %s27
      %s29 = sshll.u32 [#allocation5], 4
      %s30 = int_to_ptr.vmem [resolvable:$true] %s29
      %32 = dma.hbm_to_vmem [thread:$0]  %s28, 128, %s30, [#allocation6]
    $region9: #{_sampling_call.1} parent=1 // pred_fallthru
      _
    // Predicated region
    $region10: #{_sampling_call.1} parent=1 // pred_check
      _
    $region11: #{_sampling_call.1} parent=1 // pred_check_branch
      %34 = sbr.rel (0) target = $region13
    $region12: #{_sampling_call.1} parent=1 // pred_region
      %36 = vsyncadd [#allocation6], 0
      %s38 = sshll.u32 %s2, 4
      %s39 = int_to_ptr.hbm [resolvable:$true] %s38
      %s40 = sshll.u32 [#allocation7], 4
      %s41 = int_to_ptr.vmem [resolvable:$true] %s40
      %43 = dma.hbm_to_vmem [thread:$0]  %s39, 128, %s41, [#allocation6]
    $region13: #{_sampling_call.1} parent=1 // pred_fallthru
      _
    // Predicated region
    $region14: #{_sampling_call.1} parent=1 // pred_check
      _
    $region15: #{_sampling_call.1} parent=1 // pred_check_branch
      %45 = sbr.rel (0) target = $region17
    $region16: #{_sampling_call.1} parent=1 // pred_region
      %47 = dma.done [#allocation3], 128
    $region17: #{_sampling_call.1} parent=1 // pred_fallthru
      _
    // Predicated region
    $region18: #{_sampling_call.1} parent=1 // pred_check
      _
    $region19: #{_sampling_call.1} parent=1 // pred_check_branch
      %49 = sbr.rel (0) target = $region21
    $region20: #{_sampling_call.1} parent=1 // pred_region
      %51 = dma.done [#allocation6], 128
    $region21: #{_sampling_call.1} parent=1 // pred_fallthru
      _
    // Predicated region
    $region22: #{_sampling_call.1} parent=1 // pred_check
      _
    $region23: #{_sampling_call.1} parent=1 // pred_check_branch
      %53 = sbr.rel (0) target = $region25
    $region24: #{_sampling_call.1} parent=1 // pred_region
      %55 = dma.done [#allocation6], 128
    $region25: #{_sampling_call.1} parent=1 // pred_fallthru
      _
    %v56 = vld [vmem:[#allocation2] sm:$0xff]
    %v57 = vld [vmem:[#allocation5] sm:$0xff]
    %v58 = vld [vmem:[#allocation7] sm:$0xff]
    %v59 = vmul.f32 %v57, 0.5
    %v60 = vmul.f32 %v59, 1.442695
    %v61 = vpow.pop %v60
    %v62 = vmul.f32 %v61, %v58
    %v63 = vadd.f32 %v56, %v62
    %64 = vst [vmem:[#allocation8] sm:$0xff] %v63
    // Predicated region
    $region26: #{_sampling_call.1} parent=1 // pred_check
      _
    $region27: #{_sampling_call.1} parent=1 // pred_check_branch
      %66 = sbr.rel (0) target = $region29
    $region28: #{_sampling_call.1} parent=1 // pred_region
      %68 = vsyncadd [#allocation4], 0
      %s70 = sshll.u32 [#allocation8], 4
      %s71 = int_to_ptr.vmem [resolvable:$true] %s70
      %s72 = sshll.u32 %s3, 4
      %s73 = int_to_ptr.hbm [resolvable:$true] %s72
      %75 = dma.vmem_to_hbm [thread:$0]  %s71, 128, %s73, [#allocation4]
    $region29: #{_sampling_call.1} parent=1 // pred_fallthru
      _
    // Predicated region
    $region30: #{_sampling_call.1} parent=1 // pred_check
      _
    $region31: #{_sampling_call.1} parent=1 // pred_check_branch
      %77 = sbr.rel (0) target = $region33
    $region32: #{_sampling_call.1} parent=1 // pred_region
      %79 = dma.done [#allocation4], 128
    $region33: #{_sampling_call.1} parent=1 // pred_fallthru
      _
    %80 = vsyncpa [#allocation3], 1
    %81 = vsyncpa [#allocation6], 1
    %82 = vsyncpa [#allocation4], 1

</llo_original>
